<compile_context>
chip_gen: v7x
topology: tpu7x:2x2x1
jax: 0.10.0
libtpu: 0.0.40
codegen_flags: <defaults>
</compile_context>

<pallas_src>
import jax
import jax.numpy as jnp
from jax import lax
from jax.experimental import pallas as pl
from jax.experimental.pallas import tpu as pltpu


def _round_up(x, m):
    return (x + m - 1) // m * m


def embeddings_kernel(tok_ids_ref, pos_ids_ref, tok_tab_ref, pos_tab_ref,
                      gamma_ref, beta_ref, o_ref):
    # tok_ids_ref / pos_ids_ref : (tm, 1) int32   tile of token / position ids
    # tok_tab_ref               : (V, H)          token embedding table (resident)
    # pos_tab_ref               : (L, H)          position embedding table (resident)
    # gamma_ref / beta_ref      : (1, H)          LayerNorm params
    # o_ref                     : (tm, H)         output tile (lane-dense)
    tm = tok_ids_ref.shape[0]
    V = tok_tab_ref.shape[0]
    L = pos_tab_ref.shape[0]

    tok_ids = tok_ids_ref[...]          # (tm, 1) int32
    pos_ids = pos_ids_ref[...]          # (tm, 1) int32

    # Exact embedding gather via one-hot matmul on the MXU.  One-hot values
    # (0/1) are exact in any table dtype, so the tables are never upcast;
    # accumulation happens in f32 on the MXU.
    tok_oh = (tok_ids == lax.broadcasted_iota(jnp.int32, (tm, V), 1)
              ).astype(tok_tab_ref.dtype)
    pos_oh = (pos_ids == lax.broadcasted_iota(jnp.int32, (tm, L), 1)
              ).astype(pos_tab_ref.dtype)

    e = jnp.dot(tok_oh, tok_tab_ref[...], preferred_element_type=jnp.float32)
    e = e + jnp.dot(pos_oh, pos_tab_ref[...], preferred_element_type=jnp.float32)

    # TF-style LayerNorm over the hidden axis (biased variance, eps inside sqrt).
    u = jnp.mean(e, axis=-1, keepdims=True)
    d = e - u
    s = jnp.mean(d * d, axis=-1, keepdims=True)
    h = d * lax.rsqrt(s + 1e-12)        # rsqrt -> EUP slot, multiply co-issues

    out = gamma_ref[...].astype(jnp.float32) * h + beta_ref[...].astype(jnp.float32)

    # TODO(synk): training-mode dropout (cfg.p_drop_hidden) would be added here
    # via pltpu.prng_seed + pltpu.stateful_bernoulli; inference forward is identity.
    o_ref[...] = out.astype(o_ref.dtype)


def bert_embeddings(tok_ids, tok_table, pos_table, gamma, beta,
                    pos=None, *, tm=None):
    """tok_ids: [B, S] int; tok_table: [V, H]; pos_table: [L, H]."""
    B, S = tok_ids.shape
    V, H = tok_table.shape
    L, _ = pos_table.shape

    if pos is None:
        pos = jnp.broadcast_to(jnp.arange(S, dtype=jnp.int32)[None, :], (B, S))

    # Flatten (B, S) -> N rows; pad rows up to a multiple of the row tile.
    N = B * S
    if tm is None:
        tm = min(512, _round_up(N, 8))   # big tiles amortize per-step overhead
    tm = _round_up(tm, 8)                # sublane alignment
    Np = _round_up(N, tm)

    tok_flat = tok_ids.astype(jnp.int32).reshape(N)
    pos_flat = pos.astype(jnp.int32).reshape(N)
    if Np != N:
        pad = Np - N
        tok_flat = jnp.pad(tok_flat, (0, pad))   # id 0 is valid; rows discarded
        pos_flat = jnp.pad(pos_flat, (0, pad))
    tok2 = tok_flat.reshape(Np, 1)
    pos2 = pos_flat.reshape(Np, 1)
    g2 = gamma.reshape(1, H)
    b2 = beta.reshape(1, H)

    itemsize = jnp.dtype(tok_table.dtype).itemsize
    cost = pl.CostEstimate(
        flops=2 * Np * (V + L) * H + 10 * Np * H,
        transcendentals=Np,                         # rsqrt per row
        bytes_accessed=(2 * Np * 4                  # ids
                        + (V + L) * H * itemsize    # tables (read once)
                        + 2 * H * 4                 # gamma/beta
                        + Np * H * itemsize),       # output
    )

    out = pl.pallas_call(
        embeddings_kernel,
        out_shape=jax.ShapeDtypeStruct((Np, H), tok_table.dtype),
        grid_spec=pltpu.PrefetchScalarGridSpec(
            num_scalar_prefetch=0,
            grid=(Np // tm,),
            in_specs=[
                pl.BlockSpec((tm, 1), lambda r: (r, 0)),    # token ids
                pl.BlockSpec((tm, 1), lambda r: (r, 0)),    # position ids
                pl.BlockSpec((V, H), lambda r: (0, 0)),     # token table (resident)
                pl.BlockSpec((L, H), lambda r: (0, 0)),     # position table (resident)
                pl.BlockSpec((1, H), lambda r: (0, 0)),     # ln gamma
                pl.BlockSpec((1, H), lambda r: (0, 0)),     # ln beta
            ],
            out_specs=pl.BlockSpec((tm, H), lambda r: (r, 0)),
        ),
        compiler_params=pltpu.CompilerParams(
            dimension_semantics=("parallel",),
        ),
        cost_estimate=cost,
    )(tok2, pos2, tok_table, pos_table, g2, b2)

    return out[:N].reshape(B, S, H)


if __name__ == "__main__":
    # Small shapes consistent with the module: batch=2, seq=8,
    # hidden=128 (lane-dense), vocab=512, max_len=64.
    B, S, H, V, L = 2, 8, 128, 512, 64

    key = jax.random.PRNGKey(0)
    kids, ktok, kpos, kg, kb = jax.random.split(key, 5)

    tok_ids = jax.random.randint(kids, (B, S), 0, V)
    tok_table = jax.random.normal(ktok, (V, H), dtype=jnp.float32) * 0.02
    pos_table = jax.random.normal(kpos, (L, H), dtype=jnp.float32) * 0.02
    gamma = jnp.ones((H,), jnp.float32) + 0.01 * jax.random.normal(kg, (H,))
    beta = jnp.zeros((H,), jnp.float32) + 0.01 * jax.random.normal(kb, (H,))

    out = bert_embeddings(tok_ids, tok_table, pos_table, gamma, beta)
    jax.block_until_ready(out)

    # Pure-JAX reference (dropout is identity at inference).
    def ref(ids):
        pos = jnp.broadcast_to(jnp.arange(S)[None, :], (B, S))
        e = tok_table[ids] + pos_table[pos]
        u = e.mean(-1, keepdims=True)
        s = ((e - u) ** 2).mean(-1, keepdims=True)
        h = (e - u) / jnp.sqrt(s + 1e-12)
        return gamma * h + beta

    ref_out = ref(tok_ids)
    assert out.shape == (B, S, H)
    assert jnp.allclose(out, ref_out, atol=1e-5, rtol=1e-5)
    print("KERNEL_OK")
</pallas_src>

<mosaic_0001>
module attributes {stable_mosaic.version = 11 : i64} {
  func.func @embeddings_kernel(%arg0: i32, %arg1: memref<16x1xi32, #tpu.memory_space<vmem>>, %arg2: memref<16x1xi32, #tpu.memory_space<vmem>>, %arg3: memref<512x128xf32, #tpu.memory_space<vmem>>, %arg4: memref<64x128xf32, #tpu.memory_space<vmem>>, %arg5: memref<1x128xf32, #tpu.memory_space<vmem>>, %arg6: memref<1x128xf32, #tpu.memory_space<vmem>>, %arg7: memref<16x128xf32, #tpu.memory_space<vmem>>) attributes {dimension_semantics = [#tpu.dimension_semantics<parallel>], iteration_bounds = array<i64: 1>, scalar_prefetch = 0 : i64, scratch_operands = 0 : i64, tpu.core_type = #tpu.core_type<tc>, window_params = [{transform_indices = @transform_0, window_bounds = array<i64: 16, 1>}, {transform_indices = @transform_1, window_bounds = array<i64: 16, 1>}, {pipeline_mode = #tpu.pipeline_mode<synchronous>, transform_indices = @transform_2, window_bounds = array<i64: 512, 128>}, {pipeline_mode = #tpu.pipeline_mode<synchronous>, transform_indices = @transform_3, window_bounds = array<i64: 64, 128>}, {pipeline_mode = #tpu.pipeline_mode<synchronous>, transform_indices = @transform_4, window_bounds = array<i64: 1, 128>}, {pipeline_mode = #tpu.pipeline_mode<synchronous>, transform_indices = @transform_5, window_bounds = array<i64: 1, 128>}, {transform_indices = @transform_6, window_bounds = array<i64: 16, 128>}]} {
    %c0 = arith.constant 0 : index
    %c0_0 = arith.constant 0 : index
    %0 = vector.load %arg1[%c0, %c0_0] : memref<16x1xi32, #tpu.memory_space<vmem>>, vector<16x1xi32>
    %c0_1 = arith.constant 0 : index
    %c0_2 = arith.constant 0 : index
    %1 = vector.load %arg2[%c0_1, %c0_2] : memref<16x1xi32, #tpu.memory_space<vmem>>, vector<16x1xi32>
    %2 = tpu.iota {dimensions = array<i32: 1>} : vector<16x512xi32>
    %3 = vector.broadcast %0 : vector<16x1xi32> to vector<16x512xi32>
    %4 = arith.cmpi eq, %3, %2 : vector<16x512xi32>
    %5 = arith.extui %4 : vector<16x512xi1> to vector<16x512xi32>
    %6 = arith.sitofp %5 : vector<16x512xi32> to vector<16x512xf32>
    %7 = tpu.iota {dimensions = array<i32: 1>} : vector<16x64xi32>
    %8 = vector.broadcast %1 : vector<16x1xi32> to vector<16x64xi32>
    %9 = arith.cmpi eq, %8, %7 : vector<16x64xi32>
    %10 = arith.extui %9 : vector<16x64xi1> to vector<16x64xi32>
    %11 = arith.sitofp %10 : vector<16x64xi32> to vector<16x64xf32>
    %c0_3 = arith.constant 0 : index
    %c0_4 = arith.constant 0 : index
    %12 = vector.load %arg3[%c0_3, %c0_4] : memref<512x128xf32, #tpu.memory_space<vmem>>, vector<512x128xf32>
    %cst = arith.constant dense<0.000000e+00> : vector<16x128xf32>
    %13 = tpu.matmul %6, %12, %cst {dimension_numbers = #tpu.dot_dimension_numbers<[1], [0], [0], [1], [0, 0, 1, 1], [], []>} : vector<16x512xf32>, vector<512x128xf32>, vector<16x128xf32> -> vector<16x128xf32>
    %c0_5 = arith.constant 0 : index
    %c0_6 = arith.constant 0 : index
    %14 = vector.load %arg4[%c0_5, %c0_6] : memref<64x128xf32, #tpu.memory_space<vmem>>, vector<64x128xf32>
    %cst_7 = arith.constant dense<0.000000e+00> : vector<16x128xf32>
    %15 = tpu.matmul %11, %14, %cst_7 {dimension_numbers = #tpu.dot_dimension_numbers<[1], [0], [0], [1], [0, 0, 1, 1], [], []>} : vector<16x64xf32>, vector<64x128xf32>, vector<16x128xf32> -> vector<16x128xf32>
    %16 = arith.addf %13, %15 : vector<16x128xf32>
    %cst_8 = arith.constant dense<0.000000e+00> : vector<16xf32>
    %17 = vector.multi_reduction <add>, %16, %cst_8 [1] : vector<16x128xf32> to vector<16xf32>
    %18 = vector.shape_cast %17 : vector<16xf32> to vector<16x1xf32>
    %cst_9 = arith.constant 1.280000e+02 : f32
    %19 = vector.broadcast %cst_9 : f32 to vector<16x1xf32>
    %20 = arith.divf %18, %19 : vector<16x1xf32>
    %21 = vector.broadcast %20 : vector<16x1xf32> to vector<16x128xf32>
    %22 = arith.subf %16, %21 : vector<16x128xf32>
    %23 = arith.mulf %22, %22 : vector<16x128xf32>
    %cst_10 = arith.constant dense<0.000000e+00> : vector<16xf32>
    %24 = vector.multi_reduction <add>, %23, %cst_10 [1] : vector<16x128xf32> to vector<16xf32>
    %25 = vector.shape_cast %24 : vector<16xf32> to vector<16x1xf32>
    %cst_11 = arith.constant 1.280000e+02 : f32
    %26 = vector.broadcast %cst_11 : f32 to vector<16x1xf32>
    %27 = arith.divf %25, %26 : vector<16x1xf32>
    %cst_12 = arith.constant 9.99999996E-13 : f32
    %28 = vector.broadcast %cst_12 : f32 to vector<16x1xf32>
    %29 = arith.addf %27, %28 : vector<16x1xf32>
    %30 = math.rsqrt %29 : vector<16x1xf32>
    %31 = vector.broadcast %30 : vector<16x1xf32> to vector<16x128xf32>
    %32 = arith.mulf %22, %31 : vector<16x128xf32>
    %c0_13 = arith.constant 0 : index
    %c0_14 = arith.constant 0 : index
    %33 = vector.load %arg5[%c0_13, %c0_14] : memref<1x128xf32, #tpu.memory_space<vmem>>, vector<1x128xf32>
    %34 = vector.broadcast %33 : vector<1x128xf32> to vector<16x128xf32>
    %35 = arith.mulf %34, %32 : vector<16x128xf32>
    %c0_15 = arith.constant 0 : index
    %c0_16 = arith.constant 0 : index
    %36 = vector.load %arg6[%c0_15, %c0_16] : memref<1x128xf32, #tpu.memory_space<vmem>>, vector<1x128xf32>
    %37 = vector.broadcast %36 : vector<1x128xf32> to vector<16x128xf32>
    %38 = arith.addf %35, %37 : vector<16x128xf32>
    %c0_17 = arith.constant 0 : index
    %c0_18 = arith.constant 0 : index
    %39 = vector.load %arg7[%c0_17, %c0_18] : memref<16x128xf32, #tpu.memory_space<vmem>>, vector<16x128xf32>
    tpu.vector_store %arg7[%c0_17, %c0_18], %38 {strides = array<i32>} : memref<16x128xf32, #tpu.memory_space<vmem>>, vector<16x128xf32>,
    return
  }
  func.func @transform_0(%arg0: i32) -> (i32, i32) {
    %c0_i32 = arith.constant 0 : i32
    %c0_i32_0 = arith.constant 0 : i32
    return %arg0, %c0_i32 : i32, i32
  }
  func.func @transform_1(%arg0: i32) -> (i32, i32) {
    %c0_i32 = arith.constant 0 : i32
    %c0_i32_0 = arith.constant 0 : i32
    return %arg0, %c0_i32 : i32, i32
  }
  func.func @transform_2(%arg0: i32) -> (i32, i32) {
    %c0_i32 = arith.constant 0 : i32
    %c0_i32_0 = arith.constant 0 : i32
    %c0_i32_1 = arith.constant 0 : i32
    return %c0_i32, %c0_i32_0 : i32, i32
  }
  func.func @transform_3(%arg0: i32) -> (i32, i32) {
    %c0_i32 = arith.constant 0 : i32
    %c0_i32_0 = arith.constant 0 : i32
    %c0_i32_1 = arith.constant 0 : i32
    return %c0_i32, %c0_i32_0 : i32, i32
  }
  func.func @transform_4(%arg0: i32) -> (i32, i32) {
    %c0_i32 = arith.constant 0 : i32
    %c0_i32_0 = arith.constant 0 : i32
    %c0_i32_1 = arith.constant 0 : i32
    return %c0_i32, %c0_i32_0 : i32, i32
  }
  func.func @transform_5(%arg0: i32) -> (i32, i32) {
    %c0_i32 = arith.constant 0 : i32
    %c0_i32_0 = arith.constant 0 : i32
    %c0_i32_1 = arith.constant 0 : i32
    return %c0_i32, %c0_i32_0 : i32, i32
  }
  func.func @transform_6(%arg0: i32) -> (i32, i32) {
    %c0_i32 = arith.constant 0 : i32
    %c0_i32_0 = arith.constant 0 : i32
    return %arg0, %c0_i32 : i32, i32
  }
}

</mosaic_0001>

<llo_original>
// kernel: tpu_custom_call.1
$region0: #{tpu_custom_call.1}
  #allocation0 [shape = 'u32[]', space=smem, size = 0x4, offset = 0x4, fixed_abs, tag = 'smem constant byte address 0x4 - core index']
  #allocation1 [shape = 'u32[144,128]{1,0:T(1,128)}', space=vmem, size = 0x12000, scoped, tag = 'internal scratch']
  %s0 = inlined_call_operand.vmem [shape: s32[16,1], index: 0, kind: input, shape index: {}]
  %s1 = inlined_call_operand.vmem [shape: s32[16,1], index: 1, kind: input, shape index: {}]
  %s2 = inlined_call_operand.hbm [shape: f32[512,128], index: 2, kind: input, shape index: {}]
  %s3 = inlined_call_operand.hbm [shape: f32[64,128], index: 3, kind: input, shape index: {}]
  %s4 = inlined_call_operand.vmem [shape: f32[1,128], index: 4, kind: input, shape index: {}]
  %s5 = inlined_call_operand.vmem [shape: f32[1,128], index: 5, kind: input, shape index: {}]
  %s6 = inlined_call_operand.hbm [shape: f32[16,128], index: 6, kind: output, shape index: {}]
  %s7 = sld [smem:[#allocation0]]
  $region42: #{tpu_custom_call.1} parent=0
    _
  %s9 = ssub.s32 1, %s7
  %s10 = scalar_select 0, %s9, %s7
  $region1: #{tpu_custom_call.1} parent=0
    #allocation2 [shape = 'u8[262144]{0}', space=vmem, size = 0x40000, scoped, tag = 'input window, operand 2, single buffered']
    #allocation3 [shape = 's32[1]{0}', space=sflag, size = 0x4, scoped, tag = 'scoped memory for tpu_custom_call.1']
    #allocation4 [shape = 's32[1]{0}', space=sflag, size = 0x4, scoped, tag = 'scoped memory for tpu_custom_call.1']
    #allocation5 [shape = 'u8[32768]{0}', space=vmem, size = 0x8000, scoped, tag = 'input window, operand 3, single buffered']
    #allocation6 [shape = 's32[1]{0}', space=sflag, size = 0x4, scoped, tag = 'scoped memory for tpu_custom_call.1']
    #allocation7 [shape = 'u8[8192]{0}', space=vmem, size = 0x2000, scoped, tag = 'output window, operand 0, single buffered']
    %11 = vsyncpa [#allocation3], 0
    %12 = vsyncpa [#allocation6], 0
    %13 = vsyncpa [#allocation4], 0
    // Predicated region
    $region2: #{tpu_custom_call.1} parent=1 // pred_check
      _
    $region3: #{tpu_custom_call.1} parent=1 // pred_check_branch
      %15 = sbr.rel (0) target = $region5
    $region4: #{tpu_custom_call.1} parent=1 // pred_region
      _
    $region5: #{tpu_custom_call.1} parent=1 // pred_fallthru
      _
    // Predicated region
    $region6: #{tpu_custom_call.1} parent=1 // pred_check
      _
    $region7: #{tpu_custom_call.1} parent=1 // pred_check_branch
      %17 = sbr.rel (0) target = $region9
    $region8: #{tpu_custom_call.1} parent=1 // pred_region
      _
    $region9: #{tpu_custom_call.1} parent=1 // pred_fallthru
      _
    // Predicated region
    $region10: #{tpu_custom_call.1} parent=1 // pred_check
      _
    $region11: #{tpu_custom_call.1} parent=1 // pred_check_branch
      %19 = sbr.rel (0) target = $region13
    $region12: #{tpu_custom_call.1} parent=1 // pred_region
      %s21 = ssub.s32 8192, 8192
      %22 = vsyncadd [#allocation3], %s21
      %s23 = sshll.u32 [#allocation2], 4
      %s24 = int_to_ptr.vmem [resolvable:$true] %s23
      %29 = dma.hbm_to_vmem [thread:$0]  %s2, 8192, %s24, [#allocation3], 128, 128, 8
    $region13: #{tpu_custom_call.1} parent=1 // pred_fallthru
      _
    // Predicated region
    $region14: #{tpu_custom_call.1} parent=1 // pred_check
      _
    $region15: #{tpu_custom_call.1} parent=1 // pred_check_branch
      %31 = sbr.rel (0) target = $region17
    $region16: #{tpu_custom_call.1} parent=1 // pred_region
      %s33 = ssub.s32 1024, 1024
      %34 = vsyncadd [#allocation6], %s33
      %s35 = sshll.u32 [#allocation5], 4
      %s36 = int_to_ptr.vmem [resolvable:$true] %s35
      %41 = dma.hbm_to_vmem [thread:$0]  %s3, 1024, %s36, [#allocation6], 128, 128, 8
    $region17: #{tpu_custom_call.1} parent=1 // pred_fallthru
      _
    // Predicated region
    $region18: #{tpu_custom_call.1} parent=1 // pred_check
      _
    $region19: #{tpu_custom_call.1} parent=1 // pred_check_branch
      %43 = sbr.rel (0) target = $region21
    $region20: #{tpu_custom_call.1} parent=1 // pred_region
      _
    $region21: #{tpu_custom_call.1} parent=1 // pred_fallthru
      _
    // Predicated region
    $region22: #{tpu_custom_call.1} parent=1 // pred_check
      _
    $region23: #{tpu_custom_call.1} parent=1 // pred_check_branch
      %45 = sbr.rel (0) target = $region25
    $region24: #{tpu_custom_call.1} parent=1 // pred_region
      _
    $region25: #{tpu_custom_call.1} parent=1 // pred_fallthru
      _
    // Predicated region
    $region26: #{tpu_custom_call.1} parent=1 // pred_check
      _
    $region27: #{tpu_custom_call.1} parent=1 // pred_check_branch
      %47 = sbr.rel (0) target = $region29
    $region28: #{tpu_custom_call.1} parent=1 // pred_region
      %48 = dma.done [#allocation3], 8192
    $region29: #{tpu_custom_call.1} parent=1 // pred_fallthru
      _
    // Predicated region
    $region30: #{tpu_custom_call.1} parent=1 // pred_check
      _
    $region31: #{tpu_custom_call.1} parent=1 // pred_check_branch
      %50 = sbr.rel (0) target = $region33
    $region32: #{tpu_custom_call.1} parent=1 // pred_region
      %51 = dma.done [#allocation6], 1024
    $region33: #{tpu_custom_call.1} parent=1 // pred_fallthru
      _
    %v52 = vld [vmem:[%s0] sm:$0xff]
    %v53 = vld [vmem:[%s0 + $0x8] sm:$0xff]
    %v54 = vld [vmem:[%s1] sm:$0xff]
    %v55 = vld [vmem:[%s1 + $0x8] sm:$0xff]
    %v56 = vlaneseq
    %v57 = vand.u32 %v56, 127
    %v58 = vadd.s32 %v57, 128
    %v59 = vadd.s32 %v57, 256
    %v60 = vadd.s32 %v57, 384
    %61 = vset.pattern.permute.xlu0 0
    %62 = vperm.xlu0 %61, %v52
    %v63 = vpop.permute.xlu0 %62
    %64 = vset.pattern.permute.xlu0 0
    %65 = vperm.xlu0 %64, %v53
    %v66 = vpop.permute.xlu0 %65
    %vm67 = vcmp.eq.s32.totalorder %v63, %v57
    %vm68 = vcmp.eq.s32.totalorder %v63, %v58
    %vm69 = vcmp.eq.s32.totalorder %v63, %v59
    %vm70 = vcmp.eq.s32.totalorder %v63, %v60
    %vm71 = vcmp.eq.s32.totalorder %v66, %v57
    %vm72 = vcmp.eq.s32.totalorder %v66, %v58
    %vm73 = vcmp.eq.s32.totalorder %v66, %v59
    %vm74 = vcmp.eq.s32.totalorder %v66, %v60
    %v75 = vsel %vm67, 1, 0
    %v76 = vsel %vm68, 1, 0
    %v77 = vsel %vm69, 1, 0
    %v78 = vsel %vm70, 1, 0
    %v79 = vsel %vm71, 1, 0
    %v80 = vsel %vm72, 1, 0
    %v81 = vsel %vm73, 1, 0
    %v82 = vsel %vm74, 1, 0
    %v83 = vcvt.s32.f32 %v75
    %v84 = vcvt.s32.f32 %v76
    %v85 = vcvt.s32.f32 %v77
    %v86 = vcvt.s32.f32 %v78
    %v87 = vcvt.s32.f32 %v79
    %v88 = vcvt.s32.f32 %v80
    %v89 = vcvt.s32.f32 %v81
    %v90 = vcvt.s32.f32 %v82
    %91 = vset.pattern.permute.xlu0 0
    %92 = vperm.xlu0 %91, %v54
    %v93 = vpop.permute.xlu0 %92
    %94 = vset.pattern.permute.xlu0 0
    %95 = vperm.xlu0 %94, %v55
    %v96 = vpop.permute.xlu0 %95
    %vm97 = vcmp.eq.s32.totalorder %v93, %v57
    %vm98 = vcmp.eq.s32.totalorder %v96, %v57
    %v99 = vsel %vm97, 1, 0
    %v100 = vsel %vm98, 1, 0
    %v101 = vcvt.s32.f32 %v99
    %v102 = vcvt.s32.f32 %v100
    %v103 = vld [vmem:[#allocation2] sm:$0xff]
    %v104 = vld [vmem:[#allocation2 + $0x8] sm:$0xff]
    %v105 = vld [vmem:[#allocation2 + $0x10] sm:$0xff]
    %v106 = vld [vmem:[#allocation2 + $0x18] sm:$0xff]
    %v107 = vld [vmem:[#allocation2 + $0x20] sm:$0xff]
    %v108 = vld [vmem:[#allocation2 + $0x28] sm:$0xff]
    %v109 = vld [vmem:[#allocation2 + $0x30] sm:$0xff]
    %v110 = vld [vmem:[#allocation2 + $0x38] sm:$0xff]
    %v111 = vld [vmem:[#allocation2 + $0x40] sm:$0xff]
    %v112 = vld [vmem:[#allocation2 + $0x48] sm:$0xff]
    %v113 = vld [vmem:[#allocation2 + $0x50] sm:$0xff]
    %v114 = vld [vmem:[#allocation2 + $0x58] sm:$0xff]
    %v115 = vld [vmem:[#allocation2 + $0x60] sm:$0xff]
    %v116 = vld [vmem:[#allocation2 + $0x68] sm:$0xff]
    %v117 = vld [vmem:[#allocation2 + $0x70] sm:$0xff]
    %v118 = vld [vmem:[#allocation2 + $0x78] sm:$0xff]
    %v119 = vld [vmem:[#allocation2 + $0x80] sm:$0xff]
    %v120 = vld [vmem:[#allocation2 + $0x88] sm:$0xff]
    %v121 = vld [vmem:[#allocation2 + $0x90] sm:$0xff]
    %v122 = vld [vmem:[#allocation2 + $0x98] sm:$0xff]
    %v123 = vld [vmem:[#allocation2 + $0xa0] sm:$0xff]
    %v124 = vld [vmem:[#allocation2 + $0xa8] sm:$0xff]
    %v125 = vld [vmem:[#allocation2 + $0xb0] sm:$0xff]
    %v126 = vld [vmem:[#allocation2 + $0xb8] sm:$0xff]
    %v127 = vld [vmem:[#allocation2 + $0xc0] sm:$0xff]
    %v128 = vld [vmem:[#allocation2 + $0xc8] sm:$0xff]
    %v129 = vld [vmem:[#allocation2 + $0xd0] sm:$0xff]
    %v130 = vld [vmem:[#allocation2 + $0xd8] sm:$0xff]
    %v131 = vld [vmem:[#allocation2 + $0xe0] sm:$0xff]
    %v132 = vld [vmem:[#allocation2 + $0xe8] sm:$0xff]
    %v133 = vld [vmem:[#allocation2 + $0xf0] sm:$0xff]
    %v134 = vld [vmem:[#allocation2 + $0xf8] sm:$0xff]
    %v135 = vld [vmem:[#allocation2 + $0x100] sm:$0xff]
    %v136 = vld [vmem:[#allocation2 + $0x108] sm:$0xff]
    %v137 = vld [vmem:[#allocation2 + $0x110] sm:$0xff]
    %v138 = vld [vmem:[#allocation2 + $0x118] sm:$0xff]
    %v139 = vld [vmem:[#allocation2 + $0x120] sm:$0xff]
    %v140 = vld [vmem:[#allocation2 + $0x128] sm:$0xff]
    %v141 = vld [vmem:[#allocation2 + $0x130] sm:$0xff]
    %v142 = vld [vmem:[#allocation2 + $0x138] sm:$0xff]
    %v143 = vld [vmem:[#allocation2 + $0x140] sm:$0xff]
    %v144 = vld [vmem:[#allocation2 + $0x148] sm:$0xff]
    %v145 = vld [vmem:[#allocation2 + $0x150] sm:$0xff]
    %v146 = vld [vmem:[#allocation2 + $0x158] sm:$0xff]
    %v147 = vld [vmem:[#allocation2 + $0x160] sm:$0xff]
    %v148 = vld [vmem:[#allocation2 + $0x168] sm:$0xff]
    %v149 = vld [vmem:[#allocation2 + $0x170] sm:$0xff]
    %v150 = vld [vmem:[#allocation2 + $0x178] sm:$0xff]
    %v151 = vld [vmem:[#allocation2 + $0x180] sm:$0xff]
    %v152 = vld [vmem:[#allocation2 + $0x188] sm:$0xff]
    %v153 = vld [vmem:[#allocation2 + $0x190] sm:$0xff]
    %v154 = vld [vmem:[#allocation2 + $0x198] sm:$0xff]
    %v155 = vld [vmem:[#allocation2 + $0x1a0] sm:$0xff]
    %v156 = vld [vmem:[#allocation2 + $0x1a8] sm:$0xff]
    %v157 = vld [vmem:[#allocation2 + $0x1b0] sm:$0xff]
    %v158 = vld [vmem:[#allocation2 + $0x1b8] sm:$0xff]
    %v159 = vld [vmem:[#allocation2 + $0x1c0] sm:$0xff]
    %v160 = vld [vmem:[#allocation2 + $0x1c8] sm:$0xff]
    %v161 = vld [vmem:[#allocation2 + $0x1d0] sm:$0xff]
    %v162 = vld [vmem:[#allocation2 + $0x1d8] sm:$0xff]
    %v163 = vld [vmem:[#allocation2 + $0x1e0] sm:$0xff]
    %v164 = vld [vmem:[#allocation2 + $0x1e8] sm:$0xff]
    %v165 = vld [vmem:[#allocation2 + $0x1f0] sm:$0xff]
    %v166 = vld [vmem:[#allocation2 + $0x1f8] sm:$0xff]
    %v167 = vld [vmem:[#allocation5] sm:$0xff]
    %v168 = vld [vmem:[#allocation5 + $0x8] sm:$0xff]
    %v169 = vld [vmem:[#allocation5 + $0x10] sm:$0xff]
    %v170 = vld [vmem:[#allocation5 + $0x18] sm:$0xff]
    %v171 = vld [vmem:[#allocation5 + $0x20] sm:$0xff]
    %v172 = vld [vmem:[#allocation5 + $0x28] sm:$0xff]
    %v173 = vld [vmem:[#allocation5 + $0x30] sm:$0xff]
    %v174 = vld [vmem:[#allocation5 + $0x38] sm:$0xff]
    %vm175 = vcmask 523264
    %v177 = vsel %vm175, %v101, 0
    %v180 = vsel %vm175, %v102, 0
    %182 = vmatprep.subr.mxu0 0.0
    %183 = vmatpush1.msra.mxu0 %v167
    %184 = vmatprep.subr.mxu0 0.0
    %185 = vmatpush1.msra.mxu0 %v168
    %186 = vmatprep.subr.mxu0 0.0
    %187 = vmatpush1.msra.mxu0 %v169
    %188 = vmatprep.subr.mxu0 0.0
    %189 = vmatpush1.msra.mxu0 %v170
    %190 = vmatprep.subr.mxu0 0.0
    %191 = vmatpush1.msra.mxu0 %v171
    %192 = vmatprep.subr.mxu0 0.0
    %193 = vmatpush1.msra.mxu0 %v172
    %194 = vmatprep.subr.mxu0 0.0
    %195 = vmatpush1.msra.mxu0 %v173
    %196 = vmatprep.subr.mxu0 0.0
    %197 = vmatpush1.msra.mxu0 %v174
    %198 = vmatprep.subr.mxu0 0.0
    %199 = vmatpush1.msra.mxu0 0.0
    %200 = vmatprep.subr.mxu0 0.0
    %201 = vmatpush1.msra.mxu0 0.0
    %202 = vmatprep.subr.mxu0 0.0
    %203 = vmatpush1.msra.mxu0 0.0
    %204 = vmatprep.subr.mxu0 0.0
    %205 = vmatpush1.msra.mxu0 0.0
    %206 = vmatprep.subr.mxu0 0.0
    %207 = vmatpush1.msra.mxu0 0.0
    %208 = vmatprep.subr.mxu0 0.0
    %209 = vmatpush1.msra.mxu0 0.0
    %210 = vmatprep.subr.mxu0 0.0
    %211 = vmatpush1.msra.mxu0 0.0
    %212 = vmatprep.subr.mxu0 0.0
    %213 = vmatpush1.msra.mxu0 0.0
    %214 = vmatprep.subr.mxu0 0.0
    %215 = vmatpush1.msra.mxu0 0.0
    %216 = vmatprep.subr.mxu0 0.0
    %217 = vmatpush1.msra.mxu0 0.0
    %218 = vmatprep.subr.mxu0 0.0
    %219 = vmatpush1.msra.mxu0 0.0
    %220 = vmatprep.subr.mxu0 0.0
    %221 = vmatpush1.msra.mxu0 0.0
    %222 = vmatprep.subr.mxu0 0.0
    %223 = vmatpush1.msra.mxu0 0.0
    %224 = vmatprep.subr.mxu0 0.0
    %225 = vmatpush1.msra.mxu0 0.0
    %226 = vmatprep.subr.mxu0 0.0
    %227 = vmatpush1.msra.mxu0 0.0
    %228 = vmatprep.subr.mxu0 0.0
    %229 = vmatpush1.msra.mxu0 0.0
    %230 = vmatprep.subr.mxu0 0.0
    %231 = vmatpush1.msra.mxu0 0.0
    %232 = vmatprep.subr.mxu0 0.0
    %233 = vmatpush1.msra.mxu0 0.0
    %234 = vmatprep.subr.mxu0 0.0
    %235 = vmatpush1.msra.mxu0 0.0
    %236 = vmatprep.subr.mxu0 0.0
    %237 = vmatpush1.msra.mxu0 0.0
    %238 = vmatprep.subr.mxu0 0.0
    %239 = vmatpush1.msra.mxu0 0.0
    %240 = vmatprep.subr.mxu0 0.0
    %241 = vmatpush1.msra.mxu0 0.0
    %242 = vmatprep.subr.mxu0 0.0
    %243 = vmatpush1.msra.mxu0 0.0
    %244 = vmatprep.subr.mxu0 0.0
    %245 = vmatpush1.msra.mxu0 0.0
    %246 = vmatprep.mubr.f32.mxu0 0.0
    %247 = vmatmul.mubr.f32.gmra.mrb[0].mxu0 %v177
    %v248 = vpop.f32.mrb[0].mxu0
    %v249 = vadd.f32 0.0, %v248
    %v250 = vpop.f32.mrb[0].mxu0
    %251 = vmatprep.mubr.f32.mxu0 0.0
    %252 = vmatmul.mubr.f32.gmra.mrb[0].mxu0 %v180
    %v253 = vpop.f32.mrb[0].mxu0
    %v254 = vadd.f32 0.0, %v253
    %v255 = vpop.f32.mrb[0].mxu0
    %256 = vdwg.mxu0
    %257 = vmatprep.subr.mxu0 0.0
    %258 = vmatpush1.msra.mxu0 %v103
    %259 = vmatprep.subr.mxu0 0.0
    %260 = vmatpush1.msra.mxu0 %v104
    %261 = vmatprep.subr.mxu0 0.0
    %262 = vmatpush1.msra.mxu0 %v105
    %263 = vmatprep.subr.mxu0 0.0
    %264 = vmatpush1.msra.mxu0 %v106
    %265 = vmatprep.subr.mxu0 0.0
    %266 = vmatpush1.msra.mxu0 %v107
    %267 = vmatprep.subr.mxu0 0.0
    %268 = vmatpush1.msra.mxu0 %v108
    %269 = vmatprep.subr.mxu0 0.0
    %270 = vmatpush1.msra.mxu0 %v109
    %271 = vmatprep.subr.mxu0 0.0
    %272 = vmatpush1.msra.mxu0 %v110
    %273 = vmatprep.subr.mxu0 0.0
    %274 = vmatpush1.msra.mxu0 %v111
    %275 = vmatprep.subr.mxu0 0.0
    %276 = vmatpush1.msra.mxu0 %v112
    %277 = vmatprep.subr.mxu0 0.0
    %278 = vmatpush1.msra.mxu0 %v113
    %279 = vmatprep.subr.mxu0 0.0
    %280 = vmatpush1.msra.mxu0 %v114
    %281 = vmatprep.subr.mxu0 0.0
    %282 = vmatpush1.msra.mxu0 %v115
    %283 = vmatprep.subr.mxu0 0.0
    %284 = vmatpush1.msra.mxu0 %v116
    %285 = vmatprep.subr.mxu0 0.0
    %286 = vmatpush1.msra.mxu0 %v117
    %287 = vmatprep.subr.mxu0 0.0
    %288 = vmatpush1.msra.mxu0 %v118
    %289 = vmatprep.subr.mxu0 0.0
    %290 = vmatpush1.msra.mxu0 %v119
    %291 = vmatprep.subr.mxu0 0.0
    %292 = vmatpush1.msra.mxu0 %v120
    %293 = vmatprep.subr.mxu0 0.0
    %294 = vmatpush1.msra.mxu0 %v121
    %295 = vmatprep.subr.mxu0 0.0
    %296 = vmatpush1.msra.mxu0 %v122
    %297 = vmatprep.subr.mxu0 0.0
    %298 = vmatpush1.msra.mxu0 %v123
    %299 = vmatprep.subr.mxu0 0.0
    %300 = vmatpush1.msra.mxu0 %v124
    %301 = vmatprep.subr.mxu0 0.0
    %302 = vmatpush1.msra.mxu0 %v125
    %303 = vmatprep.subr.mxu0 0.0
    %304 = vmatpush1.msra.mxu0 %v126
    %305 = vmatprep.subr.mxu0 0.0
    %306 = vmatpush1.msra.mxu0 %v127
    %307 = vmatprep.subr.mxu0 0.0
    %308 = vmatpush1.msra.mxu0 %v128
    %309 = vmatprep.subr.mxu0 0.0
    %310 = vmatpush1.msra.mxu0 %v129
    %311 = vmatprep.subr.mxu0 0.0
    %312 = vmatpush1.msra.mxu0 %v130
    %313 = vmatprep.subr.mxu0 0.0
    %314 = vmatpush1.msra.mxu0 %v131
    %315 = vmatprep.subr.mxu0 0.0
    %316 = vmatpush1.msra.mxu0 %v132
    %317 = vmatprep.subr.mxu0 0.0
    %318 = vmatpush1.msra.mxu0 %v133
    %319 = vmatprep.subr.mxu0 0.0
    %320 = vmatpush1.msra.mxu0 %v134
    %321 = vmatprep.mubr.f32.mxu0 %v84
    %322 = vmatmul.mubr.f32.gmra.mrb[0].mxu0 %v83
    %v323 = vpop.f32.mrb[0].mxu0
    %v324 = vadd.f32 %v249, %v323
    %v325 = vpop.f32.mrb[0].mxu0
    %326 = vmatprep.mubr.f32.mxu0 %v88
    %327 = vmatmul.mubr.f32.gmra.mrb[0].mxu0 %v87
    %v328 = vpop.f32.mrb[0].mxu0
    %v329 = vadd.f32 %v254, %v328
    %v330 = vpop.f32.mrb[0].mxu0
    %331 = vdwg.mxu0
    %332 = vmatprep.subr.mxu0 0.0
    %333 = vmatpush1.msra.mxu0 %v135
    %334 = vmatprep.subr.mxu0 0.0
    %335 = vmatpush1.msra.mxu0 %v136
    %336 = vmatprep.subr.mxu0 0.0
    %337 = vmatpush1.msra.mxu0 %v137
    %338 = vmatprep.subr.mxu0 0.0
    %339 = vmatpush1.msra.mxu0 %v138
    %340 = vmatprep.subr.mxu0 0.0
    %341 = vmatpush1.msra.mxu0 %v139
    %342 = vmatprep.subr.mxu0 0.0
    %343 = vmatpush1.msra.mxu0 %v140
    %344 = vmatprep.subr.mxu0 0.0
    %345 = vmatpush1.msra.mxu0 %v141
    %346 = vmatprep.subr.mxu0 0.0
    %347 = vmatpush1.msra.mxu0 %v142
    %348 = vmatprep.subr.mxu0 0.0
    %349 = vmatpush1.msra.mxu0 %v143
    %350 = vmatprep.subr.mxu0 0.0
    %351 = vmatpush1.msra.mxu0 %v144
    %352 = vmatprep.subr.mxu0 0.0
    %353 = vmatpush1.msra.mxu0 %v145
    %354 = vmatprep.subr.mxu0 0.0
    %355 = vmatpush1.msra.mxu0 %v146
    %356 = vmatprep.subr.mxu0 0.0
    %357 = vmatpush1.msra.mxu0 %v147
    %358 = vmatprep.subr.mxu0 0.0
    %359 = vmatpush1.msra.mxu0 %v148
    %360 = vmatprep.subr.mxu0 0.0
    %361 = vmatpush1.msra.mxu0 %v149
    %362 = vmatprep.subr.mxu0 0.0
    %363 = vmatpush1.msra.mxu0 %v150
    %364 = vmatprep.subr.mxu0 0.0
    %365 = vmatpush1.msra.mxu0 %v151
    %366 = vmatprep.subr.mxu0 0.0
    %367 = vmatpush1.msra.mxu0 %v152
    %368 = vmatprep.subr.mxu0 0.0
    %369 = vmatpush1.msra.mxu0 %v153
    %370 = vmatprep.subr.mxu0 0.0
    %371 = vmatpush1.msra.mxu0 %v154
    %372 = vmatprep.subr.mxu0 0.0
    %373 = vmatpush1.msra.mxu0 %v155
    %374 = vmatprep.subr.mxu0 0.0
    %375 = vmatpush1.msra.mxu0 %v156
    %376 = vmatprep.subr.mxu0 0.0
    %377 = vmatpush1.msra.mxu0 %v157
    %378 = vmatprep.subr.mxu0 0.0
    %379 = vmatpush1.msra.mxu0 %v158
    %380 = vmatprep.subr.mxu0 0.0
    %381 = vmatpush1.msra.mxu0 %v159
    %382 = vmatprep.subr.mxu0 0.0
    %383 = vmatpush1.msra.mxu0 %v160
    %384 = vmatprep.subr.mxu0 0.0
    %385 = vmatpush1.msra.mxu0 %v161
    %386 = vmatprep.subr.mxu0 0.0
    %387 = vmatpush1.msra.mxu0 %v162
    %388 = vmatprep.subr.mxu0 0.0
    %389 = vmatpush1.msra.mxu0 %v163
    %390 = vmatprep.subr.mxu0 0.0
    %391 = vmatpush1.msra.mxu0 %v164
    %392 = vmatprep.subr.mxu0 0.0
    %393 = vmatpush1.msra.mxu0 %v165
    %394 = vmatprep.subr.mxu0 0.0
    %395 = vmatpush1.msra.mxu0 %v166
    %396 = vmatprep.mubr.f32.mxu0 %v86
    %397 = vmatmul.mubr.f32.gmra.mrb[0].mxu0 %v85
    %v398 = vpop.f32.mrb[0].mxu0
    %v399 = vadd.f32 %v324, %v398
    %v400 = vpop.f32.mrb[0].mxu0
    %401 = vmatprep.mubr.f32.mxu0 %v90
    %402 = vmatmul.mubr.f32.gmra.mrb[0].mxu0 %v89
    %v403 = vpop.f32.mrb[0].mxu0
    %v404 = vadd.f32 %v329, %v403
    %v405 = vpop.f32.mrb[0].mxu0
    %406 = vdwg.mxu0
    %407 = vadd.xlane.f32.xlu0 %v399
    %v408 = vpop.xlane.xlu0 %407
    %409 = vadd.xlane.f32.xlu0 %v404
    %v410 = vpop.xlane.xlu0 %409
    %v411 = vrcp.pop 128.0
    %v412 = vmul.f32 %v408, %v411
    %v413 = vmul.f32 %v410, %v411
    %v414 = vsub.f32 %v399, %v412
    %v415 = vsub.f32 %v404, %v413
    %v416 = vmul.f32 %v414, %v414
    %v417 = vmul.f32 %v415, %v415
    %418 = vadd.xlane.f32.xlu0 %v416
    %v419 = vpop.xlane.xlu0 %418
    %420 = vadd.xlane.f32.xlu0 %v417
    %v421 = vpop.xlane.xlu0 %420
    %v422 = vmul.f32 %v419, %v411
    %v423 = vmul.f32 %v421, %v411
    %v424 = vadd.f32 %v422, 1e-12
    %v425 = vadd.f32 %v423, 1e-12
    %v426 = vrsqrt.pop %v424
    %v427 = vrsqrt.pop %v425
    %v428 = vmul.f32 %v414, %v426
    %v429 = vmul.f32 %v415, %v427
    %v430 = vld [vmem:[%s4] sm:$0x1]
    %v432 = vlaneseq
    %v433 = vshrl.u32 %v432, 7
    %v434 = vsub.s32 0, %v433
    %v435 = vrot.slane %v430, %v434
    %v437 = vmul.f32 %v435, %v428
    %v438 = vmul.f32 %v435, %v429
    %v439 = vld [vmem:[%s5] sm:$0x1]
    %v441 = vlaneseq
    %v442 = vshrl.u32 %v441, 7
    %v443 = vsub.s32 0, %v442
    %v444 = vrot.slane %v439, %v443
    %v446 = vadd.f32 %v437, %v444
    %v447 = vadd.f32 %v438, %v444
    %448 = vst [vmem:[#allocation7] sm:$0xff] %v446
    %449 = vst [vmem:[#allocation7 + $0x8] sm:$0xff] %v447
    // Predicated region
    $region34: #{tpu_custom_call.1} parent=1 // pred_check
      _
    $region35: #{tpu_custom_call.1} parent=1 // pred_check_branch
      %451 = sbr.rel (0) target = $region37
    $region36: #{tpu_custom_call.1} parent=1 // pred_region
      %s453 = ssub.s32 256, 256
      %454 = vsyncadd [#allocation4], %s453
      %s455 = sshll.u32 [#allocation7], 4
      %s456 = int_to_ptr.vmem [resolvable:$true] %s455
      %461 = dma.vmem_to_hbm [thread:$0]  %s456, 256, %s6, [#allocation4], 128, 128, 8
    $region37: #{tpu_custom_call.1} parent=1 // pred_fallthru
      _
    // Predicated region
    $region38: #{tpu_custom_call.1} parent=1 // pred_check
      _
    $region39: #{tpu_custom_call.1} parent=1 // pred_check_branch
      %463 = sbr.rel (0) target = $region41
    $region40: #{tpu_custom_call.1} parent=1 // pred_region
      %464 = dma.done [#allocation4], 256
    $region41: #{tpu_custom_call.1} parent=1 // pred_fallthru
      _
    %465 = vsyncpa [#allocation3], 1
    %466 = vsyncpa [#allocation6], 1
    %467 = vsyncpa [#allocation4], 1

</llo_original>
